<compile_context>
chip_gen: v5e
topology: v5e:2x2
jax: 0.10.0
libtpu: 0.0.40
codegen_flags: <defaults>
</compile_context>

<pallas_src>
import functools

import jax
import jax.numpy as jnp
from jax.experimental import pallas as pl
from jax.experimental.pallas import tpu as pltpu

_MIB = 1024 * 1024
# ~1-4 MiB streaming tiles sit at >=85% of the HBM roofline (per-step overhead
# ~0.35 us); bigger buys almost nothing on a bandwidth-bound op.
_TARGET_BLOCK_BYTES = 4 * _MIB
# Keep >= this many grid steps when the row count allows it: 2 per TensorCore
# on v7x (2 TCs/chip) and >=2 everywhere so DMA double-buffers against compute.
_MIN_GRID_STEPS = 4


def _rmsnorm_kernel(x_ref, w_ref, o_ref, *, eps):
    # x_ref: (tile_rows, dim)  w_ref: (1, dim)  o_ref: (tile_rows, dim)
    x = x_ref[...].astype(jnp.float32)
    w = w_ref[...].astype(jnp.float32)
    ms = jnp.mean(x * x, axis=-1, keepdims=True)
    # Single f32 chain, one downcast at the end (rsqrt goes to the EUP slot).
    o_ref[...] = (x * jax.lax.rsqrt(ms + eps) * w).astype(o_ref.dtype)


def _sublane_multiple(dtype):
    # Rows per packed sublane: f32 -> 8, bf16/f16 -> 16, 8-bit -> 32.
    itemsize = jnp.dtype(dtype).itemsize
    return {4: 8, 2: 16, 1: 32}.get(itemsize, 8)


def _vmem_budget_bytes():
    # Per-TensorCore VMEM.  v5e/v6e: 128 MiB, v7x: 64 MiB.  Clamp to 64 MiB so
    # an ambiguous per-chip figure on v7x can never overshoot; ~4 MiB tiles
    # already hit the HBM roofline, so the clamp costs nothing on 128 MiB chips.
    cap = 64 * _MIB
    try:
        info = pltpu.get_tpu_info()
        reported = int(getattr(info, "vmem_capacity_bytes", 0) or 0)
        if reported:
            cap = min(reported, cap)
    except Exception:
        pass
    return cap


def _vmem_per_row_bytes(dim, in_dtype, out_dtype):
    in_isz = jnp.dtype(in_dtype).itemsize
    out_isz = jnp.dtype(out_dtype).itemsize
    # Double-buffered input + output blocks, plus f32 working copies
    # (f32 input: the upcast is a no-op -> ~1 temp; narrow dtypes -> ~2).
    f32_temps = 1 if in_isz == 4 else 2
    return dim * (2 * in_isz + 2 * out_isz + 4 * f32_temps)


def _pick_tile_rows(rows, dim, in_dtype, out_dtype):
    in_isz = jnp.dtype(in_dtype).itemsize
    sublane = max(_sublane_multiple(in_dtype), _sublane_multiple(out_dtype))

    per_row = _vmem_per_row_bytes(dim, in_dtype, out_dtype)
    budget = _vmem_budget_bytes() // 2            # headroom for compiler scratch
    rows_by_vmem = max(sublane, budget // max(per_row, 1))
    rows_by_target = max(sublane, _TARGET_BLOCK_BYTES // max(dim * in_isz, 1))
    rows_aligned = pl.cdiv(rows, sublane) * sublane

    tile = min(rows_aligned, rows_by_target, rows_by_vmem)
    tile = max(sublane, (tile // sublane) * sublane)

    # Guarantee >= _MIN_GRID_STEPS grid steps whenever rows permit (megacore
    # split on v7x + double-buffer overlap on single-TC chips).
    steps_cap = (rows // _MIN_GRID_STEPS) // sublane * sublane
    if steps_cap >= sublane:
        tile = min(tile, steps_cap)
    return tile


def rmsnorm(x, weight, eps=1e-6, *, tile_rows=None):
    """RMSNorm over the last axis of x.   x: (..., dim)   weight: (dim,)"""
    orig_shape = x.shape
    dim = orig_shape[-1]
    rows = 1
    for s in orig_shape[:-1]:
        rows *= s

    # `output * self.weight` in PyTorch promotes (e.g. bf16 x * f32 weight -> f32).
    out_dtype = jnp.result_type(x.dtype, weight.dtype)

    x2d = x.reshape(rows, dim)
    w2d = weight.reshape(1, dim)

    sublane = max(_sublane_multiple(x.dtype), _sublane_multiple(out_dtype))
    if tile_rows is None:
        tile_rows = _pick_tile_rows(rows, dim, x.dtype, out_dtype)
    else:
        tile_rows = max(sublane, (int(tile_rows) // sublane) * sublane)

    # Ragged rows: no wrapper pad/slice (each is a full extra HBM pass).
    # Pallas masks the partial last block; rows are independent so garbage in
    # the padded region never touches valid rows and OOB writes are dropped.
    grid = (pl.cdiv(rows, tile_rows),)

    needed = tile_rows * _vmem_per_row_bytes(dim, x.dtype, out_dtype) + 4 * dim * 4
    # Explicit scoped-VMEM limit (v5e default is 16 MiB); stay below v7x's
    # 64 MiB/TC physical capacity.
    vmem_limit = int(min(max(32 * _MIB, needed + 8 * _MIB), 56 * _MIB))

    out = pl.pallas_call(
        functools.partial(_rmsnorm_kernel, eps=eps),
        out_shape=jax.ShapeDtypeStruct((rows, dim), out_dtype),
        grid_spec=pltpu.PrefetchScalarGridSpec(
            num_scalar_prefetch=0,
            grid=grid,
            in_specs=[
                pl.BlockSpec((tile_rows, dim), lambda i: (i, 0)),
                pl.BlockSpec((1, dim), lambda i: (0, 0)),
            ],
            out_specs=pl.BlockSpec((tile_rows, dim), lambda i: (i, 0)),
        ),
        compiler_params=pltpu.CompilerParams(
            dimension_semantics=("parallel",),
            vmem_limit_bytes=vmem_limit,
        ),
    )(x2d, w2d)

    return out.reshape(orig_shape[:-1] + (dim,))


def _ref_rmsnorm(x, weight, eps):
    # Matches the PyTorch module: norm in f32, type_as(x), then * weight
    # (JAX promotes bf16 * f32 -> f32 just like torch).
    xf = x.astype(jnp.float32)
    normed = (xf * jax.lax.rsqrt(jnp.mean(xf * xf, axis=-1, keepdims=True) + eps))
    return normed.astype(x.dtype) * weight


if __name__ == "__main__":
    key = jax.random.PRNGKey(0)
    eps = 1e-6
    k1, k2, k3, k4, k5 = jax.random.split(key, 5)

    # Case 1: f32, nicely shaped (batch=2, seq=8, hidden=128).
    x1 = jax.random.normal(k1, (2, 8, 128), dtype=jnp.float32)
    w1 = jnp.ones((128,), dtype=jnp.float32)          # nn.Parameter(torch.ones(dim))
    y1 = jax.block_until_ready(rmsnorm(x1, w1, eps))
    assert y1.shape == x1.shape and y1.dtype == jnp.float32
    assert jnp.allclose(y1, _ref_rmsnorm(x1, w1, eps), atol=1e-5, rtol=1e-5)

    # Case 2: ragged row count (3*7 = 21 rows) -> masked partial last block.
    x2 = jax.random.normal(k2, (3, 7, 256), dtype=jnp.float32)
    w2 = 0.5 + jax.random.uniform(k3, (256,), dtype=jnp.float32)
    y2 = jax.block_until_ready(rmsnorm(x2, w2, eps))
    assert y2.shape == x2.shape and y2.dtype == jnp.float32
    assert jnp.allclose(y2, _ref_rmsnorm(x2, w2, eps), atol=1e-5, rtol=1e-5)

    # Case 3: bf16 x with bf16 weight (dtype-aware 16-row alignment).
    x3 = jax.random.normal(k4, (2, 16, 256), dtype=jnp.float32).astype(jnp.bfloat16)
    w3 = jnp.ones((256,), dtype=jnp.bfloat16)
    y3 = jax.block_until_ready(rmsnorm(x3, w3, eps))
    assert y3.shape == x3.shape and y3.dtype == jnp.bfloat16
    assert jnp.allclose(y3.astype(jnp.float32),
                        _ref_rmsnorm(x3, w3, eps).astype(jnp.float32),
                        atol=3e-2, rtol=3e-2)

    # Case 4: mixed precision (bf16 x, f32 weight) -> promotes to f32 like torch.
    x4 = jax.random.normal(k5, (4, 8, 128), dtype=jnp.float32).astype(jnp.bfloat16)
    w4 = jnp.ones((128,), dtype=jnp.float32)
    y4 = jax.block_until_ready(rmsnorm(x4, w4, eps))
    assert y4.shape == x4.shape and y4.dtype == jnp.float32
    assert jnp.allclose(y4, _ref_rmsnorm(x4, w4, eps), atol=2e-2, rtol=2e-2)

    # Case 5: multi-step grid with a ragged final block (600 rows, tile=64).
    x5 = jax.random.normal(k1, (2, 300, 128), dtype=jnp.float32)
    w5 = jnp.ones((128,), dtype=jnp.float32)
    y5 = jax.block_until_ready(rmsnorm(x5, w5, eps, tile_rows=64))
    assert y5.shape == x5.shape and y5.dtype == jnp.float32
    assert jnp.allclose(y5, _ref_rmsnorm(x5, w5, eps), atol=1e-5, rtol=1e-5)

    print("KERNEL_OK")
</pallas_src>

<mosaic_0001>
module attributes {stable_mosaic.version = 11 : i64} {
  func.func @_rmsnorm_kernel(%arg0: i32, %arg1: memref<16x128xf32, #tpu.memory_space<vmem>>, %arg2: memref<1x128xf32, #tpu.memory_space<vmem>>, %arg3: memref<16x128xf32, #tpu.memory_space<vmem>>) attributes {dimension_semantics = [#tpu.dimension_semantics<parallel>], iteration_bounds = array<i64: 1>, scalar_prefetch = 0 : i64, scratch_operands = 0 : i64, tpu.core_type = #tpu.core_type<tc>, window_params = [{transform_indices = @transform_0, window_bounds = array<i64: 16, 128>}, {pipeline_mode = #tpu.pipeline_mode<synchronous>, transform_indices = @transform_1, window_bounds = array<i64: 1, 128>}, {transform_indices = @transform_2, window_bounds = array<i64: 16, 128>}]} {
    %c0 = arith.constant 0 : index
    %c0_0 = arith.constant 0 : index
    %0 = vector.load %arg1[%c0, %c0_0] : memref<16x128xf32, #tpu.memory_space<vmem>>, vector<16x128xf32>
    %c0_1 = arith.constant 0 : index
    %c0_2 = arith.constant 0 : index
    %1 = vector.load %arg2[%c0_1, %c0_2] : memref<1x128xf32, #tpu.memory_space<vmem>>, vector<1x128xf32>
    %2 = arith.mulf %0, %0 : vector<16x128xf32>
    %cst = arith.constant dense<0.000000e+00> : vector<16xf32>
    %3 = vector.multi_reduction <add>, %2, %cst [1] : vector<16x128xf32> to vector<16xf32>
    %4 = vector.shape_cast %3 : vector<16xf32> to vector<16x1xf32>
    %cst_3 = arith.constant 1.280000e+02 : f32
    %5 = vector.broadcast %cst_3 : f32 to vector<16x1xf32>
    %6 = arith.divf %4, %5 : vector<16x1xf32>
    %cst_4 = arith.constant 9.99999997E-7 : f32
    %7 = vector.broadcast %cst_4 : f32 to vector<16x1xf32>
    %8 = arith.addf %6, %7 : vector<16x1xf32>
    %9 = math.rsqrt %8 : vector<16x1xf32>
    %10 = vector.broadcast %9 : vector<16x1xf32> to vector<16x128xf32>
    %11 = arith.mulf %0, %10 : vector<16x128xf32>
    %12 = vector.broadcast %1 : vector<1x128xf32> to vector<16x128xf32>
    %13 = arith.mulf %11, %12 : vector<16x128xf32>
    %c0_5 = arith.constant 0 : index
    %c0_6 = arith.constant 0 : index
    %14 = vector.load %arg3[%c0_5, %c0_6] : memref<16x128xf32, #tpu.memory_space<vmem>>, vector<16x128xf32>
    tpu.vector_store %arg3[%c0_5, %c0_6], %13 {strides = array<i32>} : memref<16x128xf32, #tpu.memory_space<vmem>>, vector<16x128xf32>,
    return
  }
  func.func @transform_0(%arg0: i32) -> (i32, i32) {
    %c0_i32 = arith.constant 0 : i32
    %c0_i32_0 = arith.constant 0 : i32
    return %arg0, %c0_i32 : i32, i32
  }
  func.func @transform_1(%arg0: i32) -> (i32, i32) {
    %c0_i32 = arith.constant 0 : i32
    %c0_i32_0 = arith.constant 0 : i32
    %c0_i32_1 = arith.constant 0 : i32
    return %c0_i32, %c0_i32_0 : i32, i32
  }
  func.func @transform_2(%arg0: i32) -> (i32, i32) {
    %c0_i32 = arith.constant 0 : i32
    %c0_i32_0 = arith.constant 0 : i32
    return %arg0, %c0_i32 : i32, i32
  }
}

</mosaic_0001>

<llo_original>
// kernel: tpu_custom_call.1
$region0: #{tpu_custom_call.1}
  #allocation0 [shape = 'u32[]', space=smem, size = 0x4, offset = 0x4, fixed_abs, tag = 'smem constant byte address 0x4 - core index']
  #allocation1 [shape = 'u32[72,128]{1,0:T(1,128)}', space=vmem, size = 0x9000, scoped, tag = 'internal scratch']
  %s0 = inlined_call_operand.hbm [shape: f32[16,128], index: 0, kind: input, shape index: {}]
  %s1 = inlined_call_operand.hbm [shape: f32[1,128], index: 1, kind: input, shape index: {}]
  %s2 = inlined_call_operand.hbm [shape: f32[16,128], index: 2, kind: output, shape index: {}]
  %s3 = sld [smem:[#allocation0]]
  $region26: #{tpu_custom_call.1} parent=0
    _
  %s5 = ssub.s32 1, %s3
  %s6 = scalar_select 0, %s5, %s3
  $region1: #{tpu_custom_call.1} parent=0
    #allocation2 [shape = 'u8[8192]{0}', space=vmem, size = 0x2000, scoped, tag = 'input window, operand 0, single buffered']
    #allocation3 [shape = 's32[1]{0}', space=sflag, size = 0x4, scoped, tag = 'scoped memory for tpu_custom_call.1']
    #allocation4 [shape = 's32[1]{0}', space=sflag, size = 0x4, scoped, tag = 'scoped memory for tpu_custom_call.1']
    #allocation5 [shape = 'u8[512]{0}', space=vmem, size = 0x400, scoped, tag = 'input window, operand 1, single buffered']
    #allocation6 [shape = 's32[1]{0}', space=sflag, size = 0x4, scoped, tag = 'scoped memory for tpu_custom_call.1']
    #allocation7 [shape = 'u8[8192]{0}', space=vmem, size = 0x2000, scoped, tag = 'output window, operand 0, single buffered']
    %7 = vsyncpa [#allocation3], 0
    %8 = vsyncpa [#allocation6], 0
    %9 = vsyncpa [#allocation4], 0
    // Predicated region
    $region2: #{tpu_custom_call.1} parent=1 // pred_check
      _
    $region3: #{tpu_custom_call.1} parent=1 // pred_check_branch
      %11 = sbr.rel (0) target = $region5
    $region4: #{tpu_custom_call.1} parent=1 // pred_region
      %13 = vsyncadd [#allocation3], 0
      %s14 = sshll.u32 %s0, 4
      %s15 = int_to_ptr.hbm [resolvable:$true] %s14
      %s16 = sshll.u32 [#allocation2], 4
      %s17 = int_to_ptr.vmem [resolvable:$true] %s16
      %22 = dma.hbm_to_vmem [thread:$0]  %s15, 256, %s17, [#allocation3], 128, 128, 8
    $region5: #{tpu_custom_call.1} parent=1 // pred_fallthru
      _
    // Predicated region
    $region6: #{tpu_custom_call.1} parent=1 // pred_check
      _
    $region7: #{tpu_custom_call.1} parent=1 // pred_check_branch
      %24 = sbr.rel (0) target = $region9
    $region8: #{tpu_custom_call.1} parent=1 // pred_region
      %26 = vsyncadd [#allocation6], 0
      %s28 = sshll.u32 %s1, 4
      %s29 = int_to_ptr.hbm [resolvable:$true] %s28
      %s30 = sshll.u32 [#allocation5], 4
      %s31 = int_to_ptr.vmem [resolvable:$true] %s30
      %33 = dma.hbm_to_vmem [thread:$0]  %s29, 16, %s31, [#allocation6]
    $region9: #{tpu_custom_call.1} parent=1 // pred_fallthru
      _
    // Predicated region
    $region10: #{tpu_custom_call.1} parent=1 // pred_check
      _
    $region11: #{tpu_custom_call.1} parent=1 // pred_check_branch
      %35 = sbr.rel (0) target = $region13
    $region12: #{tpu_custom_call.1} parent=1 // pred_region
      %37 = dma.done [#allocation3], 256
    $region13: #{tpu_custom_call.1} parent=1 // pred_fallthru
      _
    // Predicated region
    $region14: #{tpu_custom_call.1} parent=1 // pred_check
      _
    $region15: #{tpu_custom_call.1} parent=1 // pred_check_branch
      %39 = sbr.rel (0) target = $region17
    $region16: #{tpu_custom_call.1} parent=1 // pred_region
      %41 = dma.done [#allocation6], 16
    $region17: #{tpu_custom_call.1} parent=1 // pred_fallthru
      _
    %v42 = vld [vmem:[#allocation2] sm:$0xff]
    %v43 = vld [vmem:[#allocation2 + $0x8] sm:$0xff]
    %v44 = vld [vmem:[#allocation5] sm:$0x1]
    %v45 = vmul.f32 %v42, %v42
    %v46 = vmul.f32 %v43, %v43
    %47 = vadd.xlane.f32.xlu0 %v45
    %v48 = vpop.xlane.xlu0 %47
    %49 = vadd.xlane.f32.xlu0 %v46
    %v50 = vpop.xlane.xlu0 %49
    %v51 = vrcp.pop 128.0
    %v52 = vmul.f32 128.0, %v51
    %v53 = vsub.f32 1.0, %v52
    %v54 = vmul.f32 %v51, %v53
    %v55 = vadd.f32 %v51, %v54
    %vm56 = vweird.f32 %v51
    %v57 = vsel %vm56, %v51, %v55
    %v58 = vmul.f32 %v48, %v57
    %v59 = vmul.f32 %v50, %v57
    %v60 = vadd.f32 %v58, 1e-06
    %v61 = vadd.f32 %v59, 1e-06
    %v62 = vrsqrt.pop %v60
    %v63 = vmul.f32 %v62, %v60
    %v64 = vmul.f32 %v63, %v62
    %v65 = vmul.f32 0.5, %v64
    %v66 = vsub.f32 1.5, %v65
    %v67 = vmul.f32 %v62, %v66
    %vm68 = vweird.f32 %v60
    %vm69 = vweird.f32 %v62
    %vm70 = vmor %vm68, %vm69
    %v71 = vsel %vm70, %v62, %v67
    %v72 = vrsqrt.pop %v61
    %v73 = vmul.f32 %v72, %v61
    %v74 = vmul.f32 %v73, %v72
    %v75 = vmul.f32 0.5, %v74
    %v76 = vsub.f32 1.5, %v75
    %v77 = vmul.f32 %v72, %v76
    %vm78 = vweird.f32 %v61
    %vm79 = vweird.f32 %v72
    %vm80 = vmor %vm78, %vm79
    %v81 = vsel %vm80, %v72, %v77
    %v82 = vmul.f32 %v42, %v71
    %v83 = vmul.f32 %v43, %v81
    %v85 = vperm.slane %v44, 0
    %v87 = vmul.f32 %v82, %v85
    %v88 = vmul.f32 %v83, %v85
    %89 = vst [vmem:[#allocation7] sm:$0xff] %v87
    %90 = vst [vmem:[#allocation7 + $0x8] sm:$0xff] %v88
    // Predicated region
    $region18: #{tpu_custom_call.1} parent=1 // pred_check
      _
    $region19: #{tpu_custom_call.1} parent=1 // pred_check_branch
      %92 = sbr.rel (0) target = $region21
    $region20: #{tpu_custom_call.1} parent=1 // pred_region
      %94 = vsyncadd [#allocation4], 0
      %s95 = sshll.u32 [#allocation7], 4
      %s96 = int_to_ptr.vmem [resolvable:$true] %s95
      %s97 = sshll.u32 %s2, 4
      %s98 = int_to_ptr.hbm [resolvable:$true] %s97
      %103 = dma.vmem_to_hbm [thread:$0]  %s96, 256, %s98, [#allocation4], 128, 128, 8
    $region21: #{tpu_custom_call.1} parent=1 // pred_fallthru
      _
    // Predicated region
    $region22: #{tpu_custom_call.1} parent=1 // pred_check
      _
    $region23: #{tpu_custom_call.1} parent=1 // pred_check_branch
      %105 = sbr.rel (0) target = $region25
    $region24: #{tpu_custom_call.1} parent=1 // pred_region
      %107 = dma.done [#allocation4], 256
    $region25: #{tpu_custom_call.1} parent=1 // pred_fallthru
      _
    %108 = vsyncpa [#allocation3], 1
    %109 = vsyncpa [#allocation6], 1
    %110 = vsyncpa [#allocation4], 1

</llo_original>
